<compile_context>
chip_gen: v5e
topology: v5e:2x2
jax: 0.10.0
libtpu: 0.0.40
codegen_flags: <defaults>
</compile_context>

<pallas_src>
import jax
import jax.numpy as jnp
import numpy as np
from jax.experimental import pallas as pl
from jax.experimental.pallas import tpu as pltpu

_TILE_BYTES = 4 << 20          # per-buffer VMEM tile (~4 MiB); 4 buffers -> ~16 MiB
_VMEM_LIMIT_BYTES = 32 << 20   # explicit scoped-VMEM budget (safe on v5e/v6e/v7x)


def _identity_kernel(x_ref, o_ref):
    # Elementwise pass-through on the current VMEM tile.
    o_ref[...] = x_ref[...]


def _lane_dense_identity(x2d, tile_rows):
    rows, lanes = x2d.shape
    grid = (pl.cdiv(rows, tile_rows),)
    return pl.pallas_call(
        _identity_kernel,
        out_shape=jax.ShapeDtypeStruct((rows, lanes), x2d.dtype),
        grid_spec=pltpu.PrefetchScalarGridSpec(
            num_scalar_prefetch=0,
            grid=grid,
            in_specs=[pl.BlockSpec((tile_rows, lanes), lambda i: (i, 0))],
            out_specs=pl.BlockSpec((tile_rows, lanes), lambda i: (i, 0)),
        ),
        compiler_params=pltpu.CompilerParams(
            dimension_semantics=("parallel",),
            vmem_limit_bytes=_VMEM_LIMIT_BYTES,
        ),
        # Identity: reuse the input HBM buffer for the output.
        input_output_aliases={0: 0},
    )(x2d)


def _model_forward_impl(x: jax.Array) -> jax.Array:
    """Identity forward pass (the reference Model defines no computation)."""
    orig_shape = x.shape
    total = x.size
    if total == 0:
        return x

    # Widest lane-dense last dim that divides the element count: the reshape
    # is free (no pad before / no slice after the kernel).
    lanes = None
    for cand in (2048, 1024, 512, 256, 128):
        if total % cand == 0:
            lanes = cand
            break

    if lanes is None:
        # Odd/tiny element count: single full-extent block, still no padding.
        flat = x.reshape(1, total)
        out = pl.pallas_call(
            _identity_kernel,
            out_shape=jax.ShapeDtypeStruct((1, total), x.dtype),
            input_output_aliases={0: 0},
        )(flat)
        return out.reshape(orig_shape)

    rows = total // lanes
    x2d = x.reshape(rows, lanes)

    itemsize = x.dtype.itemsize
    cap = max(8, (_TILE_BYTES // (lanes * itemsize)) // 8 * 8)

    if rows <= 16:
        # Tiny input: single full-extent block (legal: equals full array dims).
        tile_rows = rows
    else:
        # Multiple of 8 sublanes, <= ~4 MiB per buffer, and at least 2 grid
        # steps so "parallel" can shard across both v7x TensorCores.
        half = (rows // 2) // 8 * 8
        tile_rows = min(cap, max(8, half))

    out2d = _lane_dense_identity(x2d, tile_rows)
    return out2d.reshape(orig_shape)


# Jit + donate: reshapes stay fused inside the computation and the pallas_call
# alias can resolve to x's own HBM buffer instead of forcing a defensive copy.
model_forward = jax.jit(_model_forward_impl, donate_argnums=(0,))


if __name__ == "__main__":
    key = jax.random.PRNGKey(0)
    # Small NCHW input consistent with a conv-style module.
    x = jax.random.normal(key, (2, 4, 16, 16), dtype=jnp.float32)

    # Keep a host copy for verification (x is donated to the jitted call).
    x_host = np.asarray(x)

    y = model_forward(x)
    jax.block_until_ready(y)

    # Sanity check: identity semantics.
    assert y.shape == x_host.shape and y.dtype == x_host.dtype
    assert np.allclose(np.asarray(y), x_host)

    print("KERNEL_OK")
</pallas_src>

<mosaic_0001>
module attributes {stable_mosaic.version = 11 : i64} {
  func.func @_identity_kernel(%arg0: i32, %arg1: memref<1x2048xf32, #tpu.memory_space<vmem>>, %arg2: memref<1x2048xf32, #tpu.memory_space<vmem>>) attributes {dimension_semantics = [#tpu.dimension_semantics<parallel>], iteration_bounds = array<i64: 1>, scalar_prefetch = 0 : i64, scratch_operands = 0 : i64, tpu.core_type = #tpu.core_type<tc>, window_params = [{transform_indices = @transform_0, window_bounds = array<i64: 1, 2048>}, {transform_indices = @transform_1, window_bounds = array<i64: 1, 2048>}]} {
    %c0 = arith.constant 0 : index
    %c0_0 = arith.constant 0 : index
    %0 = vector.load %arg1[%c0, %c0_0] : memref<1x2048xf32, #tpu.memory_space<vmem>>, vector<1x2048xf32>
    %c0_1 = arith.constant 0 : index
    %c0_2 = arith.constant 0 : index
    %1 = vector.load %arg2[%c0_1, %c0_2] : memref<1x2048xf32, #tpu.memory_space<vmem>>, vector<1x2048xf32>
    tpu.vector_store %arg2[%c0_1, %c0_2], %0 {strides = array<i32>} : memref<1x2048xf32, #tpu.memory_space<vmem>>, vector<1x2048xf32>,
    return
  }
  func.func @transform_0(%arg0: i32) -> (i32, i32) {
    %c0_i32 = arith.constant 0 : i32
    %c0_i32_0 = arith.constant 0 : i32
    return %arg0, %c0_i32 : i32, i32
  }
  func.func @transform_1(%arg0: i32) -> (i32, i32) {
    %c0_i32 = arith.constant 0 : i32
    %c0_i32_0 = arith.constant 0 : i32
    return %arg0, %c0_i32 : i32, i32
  }
}

</mosaic_0001>

<llo_original>
// kernel: _model_forward_impl.1
$region0: #{_model_forward_impl.1}
  #allocation0 [shape = 'u32[]', space=smem, size = 0x4, offset = 0x4, fixed_abs, tag = 'smem constant byte address 0x4 - core index']
  #allocation1 [shape = 'u32[72,128]{1,0:T(1,128)}', space=vmem, size = 0x9000, scoped, tag = 'internal scratch']
  %s0 = inlined_call_operand.vmem [shape: f32[1,2048], index: 0, kind: input, shape index: {}, may-alias: {0,1}]
  %s1 = inlined_call_operand.vmem [shape: f32[1,2048], index: 1, kind: output, shape index: {}, may-alias: {0,1}]
  %s2 = sld [smem:[#allocation0]]
  $region14: #{_model_forward_impl.1} parent=0
    _
  %s4 = ssub.s32 1, %s2
  %s5 = scalar_select 0, %s4, %s2
  // Predicated region
  $region2: #{_model_forward_impl.1} parent=0 // pred_check
    _
  $region3: #{_model_forward_impl.1} parent=0 // pred_check_branch
    %7 = sbr.rel (0) target = $region5
  $region4: #{_model_forward_impl.1} parent=0 // pred_region
    _
  $region5: #{_model_forward_impl.1} parent=0 // pred_fallthru
    _
  %v8 = vld [vmem:[%s0] sm:$0xff]
  %v9 = vld [vmem:[%s0 + $0x8] sm:$0xff]
  %10 = vst [vmem:[%s1] sm:$0xff] %v8
  %11 = vst [vmem:[%s1 + $0x8] sm:$0xff] %v9
  // Predicated region
  $region6: #{_model_forward_impl.1} parent=0 // pred_check
    _
  $region7: #{_model_forward_impl.1} parent=0 // pred_check_branch
    %13 = sbr.rel (0) target = $region9
  $region8: #{_model_forward_impl.1} parent=0 // pred_region
    _
  $region9: #{_model_forward_impl.1} parent=0 // pred_fallthru
    _
  // Predicated region
  $region10: #{_model_forward_impl.1} parent=0 // pred_check
    _
  $region11: #{_model_forward_impl.1} parent=0 // pred_check_branch
    %15 = sbr.rel (0) target = $region13
  $region12: #{_model_forward_impl.1} parent=0 // pred_region
    _
  $region13: #{_model_forward_impl.1} parent=0 // pred_fallthru
    _

</llo_original>
